<compile_context>
chip_gen: v7x
topology: tpu7x:2x2x1
jax: 0.10.0
libtpu: 0.0.40
codegen_flags: <defaults>
</compile_context>

<pallas_src>
import math
import functools

import jax
import jax.numpy as jnp
from jax.experimental import pallas as pl
from jax.experimental.pallas import tpu as pltpu


def _round_up(x, m):
    return ((x + m - 1) // m) * m


def _choose_batch_tile(batch, max_tile=1024):
    """Pick the batch tile: big tiles (<=1024 rows) but >=2 grid steps when
    the batch allows, so v7x's two TensorCores both get work."""
    b8 = _round_up(batch, 8)
    if b8 <= 16:                      # tiny batches: single tile
        return b8
    n_steps = max(2, -(-b8 // max_tile))          # ceil div, at least 2
    tb = _round_up(-(-b8 // n_steps), 8)
    return min(tb, max_tile)


def _actor_kernel(x_ref, w1_ref, b1_ref, w2_ref, b2_ref, wmu_ref, bmu_ref,
                  mu_ref, *, mu_scale, mu_shift):
    # hidden layer 1: bf16 matmul, f32 accumulation; f32 bias add + ReLU
    h = jnp.dot(x_ref[...], w1_ref[...], preferred_element_type=jnp.float32)
    h = jnp.maximum(h + b1_ref[...], 0.0)

    # hidden layer 2
    h = jnp.dot(h.astype(w2_ref.dtype), w2_ref[...],
                preferred_element_type=jnp.float32)
    h = jnp.maximum(h + b2_ref[...], 0.0)

    # mu head (lane-padded to a multiple of 128 -> unmasked full-lane stores)
    mu = jnp.dot(h.astype(wmu_ref.dtype), wmu_ref[...],
                 preferred_element_type=jnp.float32) + bmu_ref[...]

    if mu_scale is not None:
        # bounded actions, affine folded into trace-time scalars:
        #   mu = tanh(mu) * (high-low)/2 + (high+low)/2
        mu = jnp.tanh(mu) * mu_scale + mu_shift

    mu_ref[...] = mu.astype(mu_ref.dtype)


def prepare_params(params, compute_dtype=jnp.bfloat16):
    """One-time parameter prep (do this OUTSIDE the rollout/training loop):
    cast weight matrices to the compute dtype, keep biases in f32, and
    zero-pad the mu head to a lane-dense width of 128."""
    w1, b1, w2, b2, wmu, bmu, log_std = params
    A = wmu.shape[1]
    A_pad = _round_up(A, 128)

    return {
        "w1": w1.astype(compute_dtype),
        "b1": b1.reshape(1, -1).astype(jnp.float32),
        "w2": w2.astype(compute_dtype),
        "b2": b2.reshape(1, -1).astype(jnp.float32),
        "wmu": jnp.pad(wmu.astype(compute_dtype), ((0, 0), (0, A_pad - A))),
        "bmu": jnp.pad(bmu.astype(jnp.float32), (0, A_pad - A)).reshape(1, -1),
        "log_std": log_std.astype(jnp.float32),
        "action_dim": A,
        "compute_dtype": compute_dtype,
    }


def actor_forward(state, prepped, action_bounds=None):
    """Pallas forward pass. state: [B, input_dim] float32. Returns (mu, std)."""
    B, input_dim = state.shape
    w1, b1 = prepped["w1"], prepped["b1"]
    w2, b2 = prepped["w2"], prepped["b2"]
    wmu, bmu = prepped["wmu"], prepped["bmu"]
    log_std = prepped["log_std"]
    A = prepped["action_dim"]
    compute_dtype = prepped["compute_dtype"]

    H1 = w1.shape[1]
    H2 = w2.shape[1]
    A_pad = wmu.shape[1]

    # Fold action bounds into two Python-float scalars at trace time.
    # TODO(synk): per-dimension (array-valued) action bounds would need to be
    # applied after the [:, :A] slice in the wrapper instead.
    if action_bounds is not None:
        low, high = float(action_bounds[0]), float(action_bounds[1])
        mu_scale = (high - low) * 0.5
        mu_shift = (high + low) * 0.5
        out_dtype = compute_dtype      # tanh-bounded: bf16 output halves HBM
    else:
        mu_scale = None
        mu_shift = None
        out_dtype = jnp.float32        # unbounded: keep f32 precision

    # Batch tiling.
    TB = _choose_batch_tile(B)
    B_pad = _round_up(B, TB)
    state_c = state.astype(compute_dtype)
    if B_pad != B:
        state_c = jnp.pad(state_c, ((0, B_pad - B), (0, 0)))

    kernel = functools.partial(_actor_kernel, mu_scale=mu_scale,
                               mu_shift=mu_shift)

    mu_pad = pl.pallas_call(
        kernel,
        out_shape=jax.ShapeDtypeStruct((B_pad, A_pad), out_dtype),
        grid=(B_pad // TB,),
        in_specs=[
            pl.BlockSpec((TB, input_dim), lambda i: (i, 0)),   # state tile
            pl.BlockSpec((input_dim, H1), lambda i: (0, 0)),   # w1 (resident)
            pl.BlockSpec((1, H1), lambda i: (0, 0)),           # b1 (f32)
            pl.BlockSpec((H1, H2), lambda i: (0, 0)),          # w2 (resident)
            pl.BlockSpec((1, H2), lambda i: (0, 0)),           # b2 (f32)
            pl.BlockSpec((H2, A_pad), lambda i: (0, 0)),       # wmu (padded)
            pl.BlockSpec((1, A_pad), lambda i: (0, 0)),        # bmu (padded)
        ],
        out_specs=pl.BlockSpec((TB, A_pad), lambda i: (i, 0)),
        compiler_params=pltpu.CompilerParams(
            dimension_semantics=("parallel",)),
    )(state_c, w1, b1, w2, b2, wmu, bmu)

    mu = mu_pad[:B, :A].astype(jnp.float32)
    # std is state-independent: compute it outside the kernel in f32.
    std = jnp.broadcast_to(jnp.exp(log_std), (B, A))
    return mu, std


def init_params(key, input_dim, action_dim, hidden_dims=(256, 256)):
    """Deterministic init mimicking PyTorch nn.Linear default (+-1/sqrt(fan_in))."""
    params = []
    dims = [input_dim, *hidden_dims]
    keys = jax.random.split(key, 2 * (len(hidden_dims) + 1))
    ki = 0
    for i in range(len(hidden_dims)):
        fan_in = dims[i]
        bound = 1.0 / math.sqrt(fan_in)
        w = jax.random.uniform(keys[ki], (dims[i], dims[i + 1]),
                               minval=-bound, maxval=bound, dtype=jnp.float32)
        b = jax.random.uniform(keys[ki + 1], (dims[i + 1],),
                               minval=-bound, maxval=bound, dtype=jnp.float32)
        params.extend([w, b])
        ki += 2
    fan_in = dims[-1]
    bound = 1.0 / math.sqrt(fan_in)
    wmu = jax.random.uniform(keys[ki], (dims[-1], action_dim),
                             minval=-bound, maxval=bound, dtype=jnp.float32)
    bmu = jax.random.uniform(keys[ki + 1], (action_dim,),
                             minval=-bound, maxval=bound, dtype=jnp.float32)
    log_std = jnp.zeros((action_dim,), dtype=jnp.float32)
    return (*params, wmu, bmu, log_std)


def actor_forward_ref(state, params, action_bounds=None):
    """Pure-JAX f32 reference for correctness checking."""
    w1, b1, w2, b2, wmu, bmu, log_std = params
    h = jnp.maximum(state @ w1 + b1, 0.0)
    h = jnp.maximum(h @ w2 + b2, 0.0)
    mu = h @ wmu + bmu
    if action_bounds is not None:
        low, high = action_bounds
        mu = jnp.tanh(mu)
        mu = low + (high - low) * (mu + 1.0) / 2.0
    std = jnp.broadcast_to(jnp.exp(log_std), mu.shape)
    return mu, std


if __name__ == "__main__":
    key = jax.random.PRNGKey(0)
    k_param, k_state, k_state2 = jax.random.split(key, 3)

    batch = 8
    input_dim = 32
    action_dim = 4
    hidden_dims = (256, 256)
    action_bounds = (-2.0, 2.0)

    params = init_params(k_param, input_dim, action_dim, hidden_dims)
    prepped = prepare_params(params)            # one-time prep, hoisted
    state = jax.random.normal(k_state, (batch, input_dim), dtype=jnp.float32)

    # Bounded-action path (bf16 output, folded tanh affine).
    mu, std = actor_forward(state, prepped, action_bounds=action_bounds)
    jax.block_until_ready((mu, std))
    mu_ref, std_ref = actor_forward_ref(state, params, action_bounds)
    assert mu.shape == (batch, action_dim) and std.shape == (batch, action_dim)
    assert jnp.allclose(mu, mu_ref, atol=5e-2, rtol=5e-2)
    assert jnp.allclose(std, std_ref, atol=1e-6, rtol=1e-6)

    # Unbounded path (f32 output) on a batch that exercises >1 grid step.
    state2 = jax.random.normal(k_state2, (64, input_dim), dtype=jnp.float32)
    mu2, std2 = actor_forward(state2, prepped, action_bounds=None)
    jax.block_until_ready((mu2, std2))
    mu2_ref, std2_ref = actor_forward_ref(state2, params, None)
    assert mu2.shape == (64, action_dim) and std2.shape == (64, action_dim)
    assert jnp.allclose(mu2, mu2_ref, atol=5e-2, rtol=5e-2)
    assert jnp.allclose(std2, std2_ref, atol=1e-6, rtol=1e-6)

    print("KERNEL_OK")
</pallas_src>

<mosaic_0001>
module attributes {stable_mosaic.version = 11 : i64} {
  func.func @_actor_kernel(%arg0: i32, %arg1: memref<8x32xbf16, #tpu.memory_space<vmem>>, %arg2: memref<32x256xbf16, #tpu.memory_space<vmem>>, %arg3: memref<1x256xf32, #tpu.memory_space<vmem>>, %arg4: memref<256x256xbf16, #tpu.memory_space<vmem>>, %arg5: memref<1x256xf32, #tpu.memory_space<vmem>>, %arg6: memref<256x128xbf16, #tpu.memory_space<vmem>>, %arg7: memref<1x128xf32, #tpu.memory_space<vmem>>, %arg8: memref<8x128xbf16, #tpu.memory_space<vmem>>) attributes {dimension_semantics = [#tpu.dimension_semantics<parallel>], iteration_bounds = array<i64: 1>, scalar_prefetch = 0 : i64, scratch_operands = 0 : i64, tpu.core_type = #tpu.core_type<tc>, window_params = [{transform_indices = @transform_0, window_bounds = array<i64: 8, 32>}, {pipeline_mode = #tpu.pipeline_mode<synchronous>, transform_indices = @transform_1, window_bounds = array<i64: 32, 256>}, {pipeline_mode = #tpu.pipeline_mode<synchronous>, transform_indices = @transform_2, window_bounds = array<i64: 1, 256>}, {pipeline_mode = #tpu.pipeline_mode<synchronous>, transform_indices = @transform_3, window_bounds = array<i64: 256, 256>}, {pipeline_mode = #tpu.pipeline_mode<synchronous>, transform_indices = @transform_4, window_bounds = array<i64: 1, 256>}, {pipeline_mode = #tpu.pipeline_mode<synchronous>, transform_indices = @transform_5, window_bounds = array<i64: 256, 128>}, {pipeline_mode = #tpu.pipeline_mode<synchronous>, transform_indices = @transform_6, window_bounds = array<i64: 1, 128>}, {transform_indices = @transform_7, window_bounds = array<i64: 8, 128>}]} {
    %c0 = arith.constant 0 : index
    %c0_0 = arith.constant 0 : index
    %0 = vector.load %arg1[%c0, %c0_0] : memref<8x32xbf16, #tpu.memory_space<vmem>>, vector<8x32xbf16>
    %c0_1 = arith.constant 0 : index
    %c0_2 = arith.constant 0 : index
    %1 = vector.load %arg2[%c0_1, %c0_2] : memref<32x256xbf16, #tpu.memory_space<vmem>>, vector<32x256xbf16>
    %cst = arith.constant dense<0.000000e+00> : vector<8x256xf32>
    %2 = tpu.matmul %0, %1, %cst {dimension_numbers = #tpu.dot_dimension_numbers<[1], [0], [0], [1], [0, 0, 1, 1], [], []>} : vector<8x32xbf16>, vector<32x256xbf16>, vector<8x256xf32> -> vector<8x256xf32>
    %c0_3 = arith.constant 0 : index
    %c0_4 = arith.constant 0 : index
    %3 = vector.load %arg3[%c0_3, %c0_4] : memref<1x256xf32, #tpu.memory_space<vmem>>, vector<1x256xf32>
    %4 = vector.broadcast %3 : vector<1x256xf32> to vector<8x256xf32>
    %5 = arith.addf %2, %4 : vector<8x256xf32>
    %cst_5 = arith.constant 0.000000e+00 : f32
    %6 = vector.broadcast %cst_5 : f32 to vector<8x256xf32>
    %7 = arith.maximumf %5, %6 : vector<8x256xf32>
    %8 = arith.truncf %7 : vector<8x256xf32> to vector<8x256xbf16>
    %c0_6 = arith.constant 0 : index
    %c0_7 = arith.constant 0 : index
    %9 = vector.load %arg4[%c0_6, %c0_7] : memref<256x256xbf16, #tpu.memory_space<vmem>>, vector<256x256xbf16>
    %cst_8 = arith.constant dense<0.000000e+00> : vector<8x256xf32>
    %10 = tpu.matmul %8, %9, %cst_8 {dimension_numbers = #tpu.dot_dimension_numbers<[1], [0], [0], [1], [0, 0, 1, 1], [], []>} : vector<8x256xbf16>, vector<256x256xbf16>, vector<8x256xf32> -> vector<8x256xf32>
    %c0_9 = arith.constant 0 : index
    %c0_10 = arith.constant 0 : index
    %11 = vector.load %arg5[%c0_9, %c0_10] : memref<1x256xf32, #tpu.memory_space<vmem>>, vector<1x256xf32>
    %12 = vector.broadcast %11 : vector<1x256xf32> to vector<8x256xf32>
    %13 = arith.addf %10, %12 : vector<8x256xf32>
    %cst_11 = arith.constant 0.000000e+00 : f32
    %14 = vector.broadcast %cst_11 : f32 to vector<8x256xf32>
    %15 = arith.maximumf %13, %14 : vector<8x256xf32>
    %16 = arith.truncf %15 : vector<8x256xf32> to vector<8x256xbf16>
    %c0_12 = arith.constant 0 : index
    %c0_13 = arith.constant 0 : index
    %17 = vector.load %arg6[%c0_12, %c0_13] : memref<256x128xbf16, #tpu.memory_space<vmem>>, vector<256x128xbf16>
    %cst_14 = arith.constant dense<0.000000e+00> : vector<8x128xf32>
    %18 = tpu.matmul %16, %17, %cst_14 {dimension_numbers = #tpu.dot_dimension_numbers<[1], [0], [0], [1], [0, 0, 1, 1], [], []>} : vector<8x256xbf16>, vector<256x128xbf16>, vector<8x128xf32> -> vector<8x128xf32>
    %c0_15 = arith.constant 0 : index
    %c0_16 = arith.constant 0 : index
    %19 = vector.load %arg7[%c0_15, %c0_16] : memref<1x128xf32, #tpu.memory_space<vmem>>, vector<1x128xf32>
    %20 = vector.broadcast %19 : vector<1x128xf32> to vector<8x128xf32>
    %21 = arith.addf %18, %20 : vector<8x128xf32>
    %22 = math.tanh %21 : vector<8x128xf32>
    %cst_17 = arith.constant 2.000000e+00 : f32
    %23 = vector.broadcast %cst_17 : f32 to vector<8x128xf32>
    %24 = arith.mulf %22, %23 : vector<8x128xf32>
    %cst_18 = arith.constant 0.000000e+00 : f32
    %25 = vector.broadcast %cst_18 : f32 to vector<8x128xf32>
    %26 = arith.addf %24, %25 : vector<8x128xf32>
    %27 = arith.truncf %26 : vector<8x128xf32> to vector<8x128xbf16>
    %c0_19 = arith.constant 0 : index
    %c0_20 = arith.constant 0 : index
    %28 = vector.load %arg8[%c0_19, %c0_20] : memref<8x128xbf16, #tpu.memory_space<vmem>>, vector<8x128xbf16>
    tpu.vector_store %arg8[%c0_19, %c0_20], %27 {strides = array<i32>} : memref<8x128xbf16, #tpu.memory_space<vmem>>, vector<8x128xbf16>,
    return
  }
  func.func @transform_0(%arg0: i32) -> (i32, i32) {
    %c0_i32 = arith.constant 0 : i32
    %c0_i32_0 = arith.constant 0 : i32
    return %arg0, %c0_i32 : i32, i32
  }
  func.func @transform_1(%arg0: i32) -> (i32, i32) {
    %c0_i32 = arith.constant 0 : i32
    %c0_i32_0 = arith.constant 0 : i32
    %c0_i32_1 = arith.constant 0 : i32
    return %c0_i32, %c0_i32_0 : i32, i32
  }
  func.func @transform_2(%arg0: i32) -> (i32, i32) {
    %c0_i32 = arith.constant 0 : i32
    %c0_i32_0 = arith.constant 0 : i32
    %c0_i32_1 = arith.constant 0 : i32
    return %c0_i32, %c0_i32_0 : i32, i32
  }
  func.func @transform_3(%arg0: i32) -> (i32, i32) {
    %c0_i32 = arith.constant 0 : i32
    %c0_i32_0 = arith.constant 0 : i32
    %c0_i32_1 = arith.constant 0 : i32
    return %c0_i32, %c0_i32_0 : i32, i32
  }
  func.func @transform_4(%arg0: i32) -> (i32, i32) {
    %c0_i32 = arith.constant 0 : i32
    %c0_i32_0 = arith.constant 0 : i32
    %c0_i32_1 = arith.constant 0 : i32
    return %c0_i32, %c0_i32_0 : i32, i32
  }
  func.func @transform_5(%arg0: i32) -> (i32, i32) {
    %c0_i32 = arith.constant 0 : i32
    %c0_i32_0 = arith.constant 0 : i32
    %c0_i32_1 = arith.constant 0 : i32
    return %c0_i32, %c0_i32_0 : i32, i32
  }
  func.func @transform_6(%arg0: i32) -> (i32, i32) {
    %c0_i32 = arith.constant 0 : i32
    %c0_i32_0 = arith.constant 0 : i32
    %c0_i32_1 = arith.constant 0 : i32
    return %c0_i32, %c0_i32_0 : i32, i32
  }
  func.func @transform_7(%arg0: i32) -> (i32, i32) {
    %c0_i32 = arith.constant 0 : i32
    %c0_i32_0 = arith.constant 0 : i32
    return %arg0, %c0_i32 : i32, i32
  }
}

</mosaic_0001>

<llo_original>
// kernel: tpu_custom_call.1
$region0: #{tpu_custom_call.1}
  #allocation0 [shape = 'u32[]', space=smem, size = 0x4, offset = 0x4, fixed_abs, tag = 'smem constant byte address 0x4 - core index']
  #allocation1 [shape = 'u32[144,128]{1,0:T(1,128)}', space=vmem, size = 0x12000, scoped, tag = 'internal scratch']
  %s0 = inlined_call_operand.hbm [shape: bf16[8,32], index: 0, kind: input, shape index: {}]
  %s1 = inlined_call_operand.hbm [shape: bf16[32,256], index: 1, kind: input, shape index: {}]
  %s2 = inlined_call_operand.vmem [shape: f32[1,256], index: 2, kind: input, shape index: {}]
  %s3 = inlined_call_operand.hbm [shape: bf16[256,256], index: 3, kind: input, shape index: {}]
  %s4 = inlined_call_operand.vmem [shape: f32[1,256], index: 4, kind: input, shape index: {}]
  %s5 = inlined_call_operand.hbm [shape: bf16[256,128], index: 5, kind: input, shape index: {}]
  %s6 = inlined_call_operand.vmem [shape: f32[1,128], index: 6, kind: input, shape index: {}]
  %s7 = inlined_call_operand.hbm [shape: bf16[8,128], index: 7, kind: output, shape index: {}]
  %s8 = sld [smem:[#allocation0]]
  $region54: #{tpu_custom_call.1} parent=0
    _
  %s10 = ssub.s32 1, %s8
  %s11 = scalar_select 0, %s10, %s8
  $region1: #{tpu_custom_call.1} parent=0
    #allocation2 [shape = 'u8[2048]{0}', space=vmem, size = 0x800, scoped, tag = 'input window, operand 0, single buffered']
    #allocation3 [shape = 's32[1]{0}', space=sflag, size = 0x4, scoped, tag = 'scoped memory for tpu_custom_call.1']
    #allocation4 [shape = 's32[1]{0}', space=sflag, size = 0x4, scoped, tag = 'scoped memory for tpu_custom_call.1']
    #allocation5 [shape = 'u8[16384]{0}', space=vmem, size = 0x4000, scoped, tag = 'input window, operand 1, single buffered']
    #allocation6 [shape = 's32[1]{0}', space=sflag, size = 0x4, scoped, tag = 'scoped memory for tpu_custom_call.1']
    #allocation7 [shape = 'u8[131072]{0}', space=vmem, size = 0x20000, scoped, tag = 'input window, operand 3, single buffered']
    #allocation8 [shape = 'u8[65536]{0}', space=vmem, size = 0x10000, scoped, tag = 'input window, operand 5, single buffered']
    #allocation9 [shape = 's32[1]{0}', space=sflag, size = 0x4, scoped, tag = 'scoped memory for tpu_custom_call.1']
    #allocation10 [shape = 'u8[2048]{0}', space=vmem, size = 0x800, scoped, tag = 'output window, operand 0, single buffered']
    %12 = vsyncpa [#allocation3], 0
    %13 = vsyncpa [#allocation6], 0
    %14 = vsyncpa [#allocation9], 0
    %15 = vsyncpa [#allocation4], 0
    // Predicated region
    $region2: #{tpu_custom_call.1} parent=1 // pred_check
      _
    $region3: #{tpu_custom_call.1} parent=1 // pred_check_branch
      %17 = sbr.rel (0) target = $region5
    $region4: #{tpu_custom_call.1} parent=1 // pred_region
      %s19 = ssub.s32 64, 64
      %20 = vsyncadd [#allocation3], %s19
      %s22 = sshll.u32 [#allocation2], 4
      %s23 = int_to_ptr.vmem [resolvable:$true] %s22
      %25 = dma.hbm_to_vmem [thread:$0]  %s0, 64, %s23, [#allocation3]
    $region5: #{tpu_custom_call.1} parent=1 // pred_fallthru
      _
    // Predicated region
    $region6: #{tpu_custom_call.1} parent=1 // pred_check
      _
    $region7: #{tpu_custom_call.1} parent=1 // pred_check_branch
      %27 = sbr.rel (0) target = $region9
    $region8: #{tpu_custom_call.1} parent=1 // pred_region
      %s29 = ssub.s32 512, 512
      %30 = vsyncadd [#allocation6], %s29
      %s31 = sshll.u32 [#allocation5], 4
      %s32 = int_to_ptr.vmem [resolvable:$true] %s31
      %37 = dma.hbm_to_vmem [thread:$0]  %s1, 512, %s32, [#allocation6], 128, 128, 8
    $region9: #{tpu_custom_call.1} parent=1 // pred_fallthru
      _
    // Predicated region
    $region10: #{tpu_custom_call.1} parent=1 // pred_check
      _
    $region11: #{tpu_custom_call.1} parent=1 // pred_check_branch
      %39 = sbr.rel (0) target = $region13
    $region12: #{tpu_custom_call.1} parent=1 // pred_region
      _
    $region13: #{tpu_custom_call.1} parent=1 // pred_fallthru
      _
    // Predicated region
    $region14: #{tpu_custom_call.1} parent=1 // pred_check
      _
    $region15: #{tpu_custom_call.1} parent=1 // pred_check_branch
      %41 = sbr.rel (0) target = $region17
    $region16: #{tpu_custom_call.1} parent=1 // pred_region
      %s43 = ssub.s32 4096, 4096
      %44 = vsyncadd [#allocation6], %s43
      %s45 = sshll.u32 [#allocation7], 4
      %s46 = int_to_ptr.vmem [resolvable:$true] %s45
      %51 = dma.hbm_to_vmem [thread:$0]  %s3, 4096, %s46, [#allocation6], 128, 128, 8
    $region17: #{tpu_custom_call.1} parent=1 // pred_fallthru
      _
    // Predicated region
    $region18: #{tpu_custom_call.1} parent=1 // pred_check
      _
    $region19: #{tpu_custom_call.1} parent=1 // pred_check_branch
      %53 = sbr.rel (0) target = $region21
    $region20: #{tpu_custom_call.1} parent=1 // pred_region
      _
    $region21: #{tpu_custom_call.1} parent=1 // pred_fallthru
      _
    // Predicated region
    $region22: #{tpu_custom_call.1} parent=1 // pred_check
      _
    $region23: #{tpu_custom_call.1} parent=1 // pred_check_branch
      %55 = sbr.rel (0) target = $region25
    $region24: #{tpu_custom_call.1} parent=1 // pred_region
      %s57 = ssub.s32 2048, 2048
      %58 = vsyncadd [#allocation9], %s57
      %s59 = sshll.u32 [#allocation8], 4
      %s60 = int_to_ptr.vmem [resolvable:$true] %s59
      %65 = dma.hbm_to_vmem [thread:$0]  %s5, 2048, %s60, [#allocation9], 64, 64, 4
    $region25: #{tpu_custom_call.1} parent=1 // pred_fallthru
      _
    // Predicated region
    $region26: #{tpu_custom_call.1} parent=1 // pred_check
      _
    $region27: #{tpu_custom_call.1} parent=1 // pred_check_branch
      %67 = sbr.rel (0) target = $region29
    $region28: #{tpu_custom_call.1} parent=1 // pred_region
      _
    $region29: #{tpu_custom_call.1} parent=1 // pred_fallthru
      _
    // Predicated region
    $region30: #{tpu_custom_call.1} parent=1 // pred_check
      _
    $region31: #{tpu_custom_call.1} parent=1 // pred_check_branch
      %69 = sbr.rel (0) target = $region33
    $region32: #{tpu_custom_call.1} parent=1 // pred_region
      %70 = dma.done [#allocation3], 64
    $region33: #{tpu_custom_call.1} parent=1 // pred_fallthru
      _
    // Predicated region
    $region34: #{tpu_custom_call.1} parent=1 // pred_check
      _
    $region35: #{tpu_custom_call.1} parent=1 // pred_check_branch
      %72 = sbr.rel (0) target = $region37
    $region36: #{tpu_custom_call.1} parent=1 // pred_region
      %73 = dma.done [#allocation6], 512
    $region37: #{tpu_custom_call.1} parent=1 // pred_fallthru
      _
    // Predicated region
    $region38: #{tpu_custom_call.1} parent=1 // pred_check
      _
    $region39: #{tpu_custom_call.1} parent=1 // pred_check_branch
      %75 = sbr.rel (0) target = $region41
    $region40: #{tpu_custom_call.1} parent=1 // pred_region
      %76 = dma.done [#allocation6], 4096
    $region41: #{tpu_custom_call.1} parent=1 // pred_fallthru
      _
    // Predicated region
    $region42: #{tpu_custom_call.1} parent=1 // pred_check
      _
    $region43: #{tpu_custom_call.1} parent=1 // pred_check_branch
      %78 = sbr.rel (0) target = $region45
    $region44: #{tpu_custom_call.1} parent=1 // pred_region
      %79 = dma.done [#allocation9], 2048
    $region45: #{tpu_custom_call.1} parent=1 // pred_fallthru
      _
    %v81 = vld [vmem:[#allocation2] sm:$0xf]
    %v82 = vld [vmem:[#allocation5] sm:$0xff]
    %v83 = vld [vmem:[#allocation5 + $0x8] sm:$0xff]
    %v84 = vld [vmem:[#allocation5 + $0x10] sm:$0xff]
    %v85 = vld [vmem:[#allocation5 + $0x18] sm:$0xff]
    %v86 = vld [vmem:[%s2] sm:$0x3]
    %v88 = vlaneseq
    %v89 = vshrl.u32 %v88, 7
    %v90 = vsub.s32 0, %v89
    %v91 = vrot.slane %v86, %v90
    %v92 = vlaneseq
    %v93 = vshrl.u32 %v92, 7
    %v94 = vsub.s32 1, %v93
    %v95 = vrot.slane %v86, %v94
    %v102 = vunpack.c.l.b16 %v82
    %v103 = vunpack.c.h.b16 %v82
    %v104 = vunpack.c.l.b16 %v83
    %v105 = vunpack.c.h.b16 %v83
    %v106 = vunpack.c.l.b16 %v84
    %v107 = vunpack.c.h.b16 %v84
    %v108 = vunpack.c.l.b16 %v85
    %v109 = vunpack.c.h.b16 %v85
    %v110 = vpack.c.b16 %v104, %v102
    %v111 = vpack.c.b16 %v105, %v103
    %v112 = vpack.c.b16 %v108, %v106
    %v113 = vpack.c.b16 %v109, %v107
    %vm118 = vcmask 261120
    %v120 = vsel %vm118, %v81, 0
    %122 = vmatprep.subr.bf16.mxu0 %v111
    %123 = vmatpush1.bf16.msra.mxu0 %v110
    %124 = vmatprep.subr.bf16.mxu0 %v113
    %125 = vmatpush1.bf16.msra.mxu0 %v112
    %126 = vmatprep.subr.bf16.mxu0 0
    %127 = vmatpush1.bf16.msra.mxu0 0
    %128 = vmatprep.subr.bf16.mxu0 0
    %129 = vmatpush1.bf16.msra.mxu0 0
    %130 = vmatprep.subr.bf16.mxu0 0
    %131 = vmatpush1.bf16.msra.mxu0 0
    %132 = vmatprep.subr.bf16.mxu0 0
    %133 = vmatpush1.bf16.msra.mxu0 0
    %134 = vmatprep.subr.bf16.mxu0 0
    %135 = vmatpush1.bf16.msra.mxu0 0
    %136 = vmatprep.subr.bf16.mxu0 0
    %137 = vmatpush1.bf16.msra.mxu0 0
    %138 = vmatprep.subr.bf16.mxu0 0
    %139 = vmatpush1.bf16.msra.mxu0 0
    %140 = vmatprep.subr.bf16.mxu0 0
    %141 = vmatpush1.bf16.msra.mxu0 0
    %142 = vmatprep.subr.bf16.mxu0 0
    %143 = vmatpush1.bf16.msra.mxu0 0
    %144 = vmatprep.subr.bf16.mxu0 0
    %145 = vmatpush1.bf16.msra.mxu0 0
    %146 = vmatprep.subr.bf16.mxu0 0
    %147 = vmatpush1.bf16.msra.mxu0 0
    %148 = vmatprep.subr.bf16.mxu0 0
    %149 = vmatpush1.bf16.msra.mxu0 0
    %150 = vmatprep.subr.bf16.mxu0 0
    %151 = vmatpush1.bf16.msra.mxu0 0
    %152 = vmatprep.subr.bf16.mxu0 0
    %153 = vmatpush1.bf16.msra.mxu0 0
    %154 = vmatprep.mubr.bf16.mxu0 0
    %155 = vmatmul.mubr.bf16.gmra.mrb[0].mxu0 %v120
    %v156 = vpop.f32.mrb[0].mxu0
    %v157 = vadd.f32 %v91, %v156
    %v158 = vpop.f32.mrb[0].mxu0
    %v159 = vadd.f32 %v95, %v158
    %v160 = vpop.f32.mrb[0].mxu0
    %v161 = vpop.f32.mrb[0].mxu0
    %162 = vdwg.mxu0
    %v163 = vmax.f32 %v157, 0.0
    %v164 = vmax.f32 %v159, 0.0
    %v165 = vpack.c.bf16 %v163, %v163
    %v166 = vpack.c.bf16 %v164, %v164
    %v167 = vld [vmem:[#allocation7] sm:$0xff]
    %v168 = vld [vmem:[#allocation7 + $0x8] sm:$0xff]
    %v169 = vld [vmem:[#allocation7 + $0x10] sm:$0xff]
    %v170 = vld [vmem:[#allocation7 + $0x18] sm:$0xff]
    %v171 = vld [vmem:[#allocation7 + $0x20] sm:$0xff]
    %v172 = vld [vmem:[#allocation7 + $0x28] sm:$0xff]
    %v173 = vld [vmem:[#allocation7 + $0x30] sm:$0xff]
    %v174 = vld [vmem:[#allocation7 + $0x38] sm:$0xff]
    %v175 = vld [vmem:[#allocation7 + $0x40] sm:$0xff]
    %v176 = vld [vmem:[#allocation7 + $0x48] sm:$0xff]
    %v177 = vld [vmem:[#allocation7 + $0x50] sm:$0xff]
    %v178 = vld [vmem:[#allocation7 + $0x58] sm:$0xff]
    %v179 = vld [vmem:[#allocation7 + $0x60] sm:$0xff]
    %v180 = vld [vmem:[#allocation7 + $0x68] sm:$0xff]
    %v181 = vld [vmem:[#allocation7 + $0x70] sm:$0xff]
    %v182 = vld [vmem:[#allocation7 + $0x78] sm:$0xff]
    %v183 = vld [vmem:[#allocation7 + $0x80] sm:$0xff]
    %v184 = vld [vmem:[#allocation7 + $0x88] sm:$0xff]
    %v185 = vld [vmem:[#allocation7 + $0x90] sm:$0xff]
    %v186 = vld [vmem:[#allocation7 + $0x98] sm:$0xff]
    %v187 = vld [vmem:[#allocation7 + $0xa0] sm:$0xff]
    %v188 = vld [vmem:[#allocation7 + $0xa8] sm:$0xff]
    %v189 = vld [vmem:[#allocation7 + $0xb0] sm:$0xff]
    %v190 = vld [vmem:[#allocation7 + $0xb8] sm:$0xff]
    %v191 = vld [vmem:[#allocation7 + $0xc0] sm:$0xff]
    %v192 = vld [vmem:[#allocation7 + $0xc8] sm:$0xff]
    %v193 = vld [vmem:[#allocation7 + $0xd0] sm:$0xff]
    %v194 = vld [vmem:[#allocation7 + $0xd8] sm:$0xff]
    %v195 = vld [vmem:[#allocation7 + $0xe0] sm:$0xff]
    %v196 = vld [vmem:[#allocation7 + $0xe8] sm:$0xff]
    %v197 = vld [vmem:[#allocation7 + $0xf0] sm:$0xff]
    %v198 = vld [vmem:[#allocation7 + $0xf8] sm:$0xff]
    %v199 = vld [vmem:[%s4] sm:$0x3]
    %v201 = vlaneseq
    %v202 = vshrl.u32 %v201, 7
    %v203 = vsub.s32 0, %v202
    %v204 = vrot.slane %v199, %v203
    %v205 = vlaneseq
    %v206 = vshrl.u32 %v205, 7
    %v207 = vsub.s32 1, %v206
    %v208 = vrot.slane %v199, %v207
    %v243 = vunpack.c.l.b16 %v167
    %v244 = vunpack.c.h.b16 %v167
    %v245 = vunpack.c.l.b16 %v168
    %v246 = vunpack.c.h.b16 %v168
    %v247 = vunpack.c.l.b16 %v169
    %v248 = vunpack.c.h.b16 %v169
    %v249 = vunpack.c.l.b16 %v170
    %v250 = vunpack.c.h.b16 %v170
    %v251 = vunpack.c.l.b16 %v171
    %v252 = vunpack.c.h.b16 %v171
    %v253 = vunpack.c.l.b16 %v172
    %v254 = vunpack.c.h.b16 %v172
    %v255 = vunpack.c.l.b16 %v173
    %v256 = vunpack.c.h.b16 %v173
    %v257 = vunpack.c.l.b16 %v174
    %v258 = vunpack.c.h.b16 %v174
    %v259 = vunpack.c.l.b16 %v175
    %v260 = vunpack.c.h.b16 %v175
    %v261 = vunpack.c.l.b16 %v176
    %v262 = vunpack.c.h.b16 %v176
    %v263 = vunpack.c.l.b16 %v177
    %v264 = vunpack.c.h.b16 %v177
    %v265 = vunpack.c.l.b16 %v178
    %v266 = vunpack.c.h.b16 %v178
    %v267 = vunpack.c.l.b16 %v179
    %v268 = vunpack.c.h.b16 %v179
    %v269 = vunpack.c.l.b16 %v180
    %v270 = vunpack.c.h.b16 %v180
    %v271 = vunpack.c.l.b16 %v181
    %v272 = vunpack.c.h.b16 %v181
    %v273 = vunpack.c.l.b16 %v182
    %v274 = vunpack.c.h.b16 %v182
    %v275 = vunpack.c.l.b16 %v183
    %v276 = vunpack.c.h.b16 %v183
    %v277 = vunpack.c.l.b16 %v184
    %v278 = vunpack.c.h.b16 %v184
    %v279 = vunpack.c.l.b16 %v185
    %v280 = vunpack.c.h.b16 %v185
    %v281 = vunpack.c.l.b16 %v186
    %v282 = vunpack.c.h.b16 %v186
    %v283 = vunpack.c.l.b16 %v187
    %v284 = vunpack.c.h.b16 %v187
    %v285 = vunpack.c.l.b16 %v188
    %v286 = vunpack.c.h.b16 %v188
    %v287 = vunpack.c.l.b16 %v189
    %v288 = vunpack.c.h.b16 %v189
    %v289 = vunpack.c.l.b16 %v190
    %v290 = vunpack.c.h.b16 %v190
    %v291 = vunpack.c.l.b16 %v191
    %v292 = vunpack.c.h.b16 %v191
    %v293 = vunpack.c.l.b16 %v192
    %v294 = vunpack.c.h.b16 %v192
    %v295 = vunpack.c.l.b16 %v193
    %v296 = vunpack.c.h.b16 %v193
    %v297 = vunpack.c.l.b16 %v194
    %v298 = vunpack.c.h.b16 %v194
    %v299 = vunpack.c.l.b16 %v195
    %v300 = vunpack.c.h.b16 %v195
    %v301 = vunpack.c.l.b16 %v196
    %v302 = vunpack.c.h.b16 %v196
    %v303 = vunpack.c.l.b16 %v197
    %v304 = vunpack.c.h.b16 %v197
    %v305 = vunpack.c.l.b16 %v198
    %v306 = vunpack.c.h.b16 %v198
    %v307 = vpack.c.b16 %v245, %v243
    %v308 = vpack.c.b16 %v246, %v244
    %v309 = vpack.c.b16 %v249, %v247
    %v310 = vpack.c.b16 %v250, %v248
    %v311 = vpack.c.b16 %v253, %v251
    %v312 = vpack.c.b16 %v254, %v252
    %v313 = vpack.c.b16 %v257, %v255
    %v314 = vpack.c.b16 %v258, %v256
    %v315 = vpack.c.b16 %v261, %v259
    %v316 = vpack.c.b16 %v262, %v260
    %v317 = vpack.c.b16 %v265, %v263
    %v318 = vpack.c.b16 %v266, %v264
    %v319 = vpack.c.b16 %v269, %v267
    %v320 = vpack.c.b16 %v270, %v268
    %v321 = vpack.c.b16 %v273, %v271
    %v322 = vpack.c.b16 %v274, %v272
    %v323 = vpack.c.b16 %v277, %v275
    %v324 = vpack.c.b16 %v278, %v276
    %v325 = vpack.c.b16 %v281, %v279
    %v326 = vpack.c.b16 %v282, %v280
    %v327 = vpack.c.b16 %v285, %v283
    %v328 = vpack.c.b16 %v286, %v284
    %v329 = vpack.c.b16 %v289, %v287
    %v330 = vpack.c.b16 %v290, %v288
    %v331 = vpack.c.b16 %v293, %v291
    %v332 = vpack.c.b16 %v294, %v292
    %v333 = vpack.c.b16 %v297, %v295
    %v334 = vpack.c.b16 %v298, %v296
    %v335 = vpack.c.b16 %v301, %v299
    %v336 = vpack.c.b16 %v302, %v300
    %v337 = vpack.c.b16 %v305, %v303
    %v338 = vpack.c.b16 %v306, %v304
    %371 = vmatprep.subr.bf16.mxu0 %v308
    %372 = vmatpush1.bf16.msra.mxu0 %v307
    %373 = vmatprep.subr.bf16.mxu0 %v310
    %374 = vmatpush1.bf16.msra.mxu0 %v309
    %375 = vmatprep.subr.bf16.mxu0 %v312
    %376 = vmatpush1.bf16.msra.mxu0 %v311
    %377 = vmatprep.subr.bf16.mxu0 %v314
    %378 = vmatpush1.bf16.msra.mxu0 %v313
    %379 = vmatprep.subr.bf16.mxu0 %v316
    %380 = vmatpush1.bf16.msra.mxu0 %v315
    %381 = vmatprep.subr.bf16.mxu0 %v318
    %382 = vmatpush1.bf16.msra.mxu0 %v317
    %383 = vmatprep.subr.bf16.mxu0 %v320
    %384 = vmatpush1.bf16.msra.mxu0 %v319
    %385 = vmatprep.subr.bf16.mxu0 %v322
    %386 = vmatpush1.bf16.msra.mxu0 %v321
    %387 = vmatprep.subr.bf16.mxu0 %v324
    %388 = vmatpush1.bf16.msra.mxu0 %v323
    %389 = vmatprep.subr.bf16.mxu0 %v326
    %390 = vmatpush1.bf16.msra.mxu0 %v325
    %391 = vmatprep.subr.bf16.mxu0 %v328
    %392 = vmatpush1.bf16.msra.mxu0 %v327
    %393 = vmatprep.subr.bf16.mxu0 %v330
    %394 = vmatpush1.bf16.msra.mxu0 %v329
    %395 = vmatprep.subr.bf16.mxu0 %v332
    %396 = vmatpush1.bf16.msra.mxu0 %v331
    %397 = vmatprep.subr.bf16.mxu0 %v334
    %398 = vmatpush1.bf16.msra.mxu0 %v333
    %399 = vmatprep.subr.bf16.mxu0 %v336
    %400 = vmatpush1.bf16.msra.mxu0 %v335
    %401 = vmatprep.subr.bf16.mxu0 %v338
    %402 = vmatpush1.bf16.msra.mxu0 %v337
    %403 = vmatprep.mubr.bf16.mxu0 %v166
    %404 = vmatmul.mubr.bf16.gmra.mrb[0].mxu0 %v165
    %v405 = vpop.f32.mrb[0].mxu0
    %v406 = vadd.f32 %v204, %v405
    %v407 = vpop.f32.mrb[0].mxu0
    %v408 = vadd.f32 %v208, %v407
    %v409 = vpop.f32.mrb[0].mxu0
    %v410 = vpop.f32.mrb[0].mxu0
    %411 = vdwg.mxu0
    %v412 = vmax.f32 %v406, 0.0
    %v413 = vmax.f32 %v408, 0.0
    %v414 = vpack.c.bf16 %v412, %v412
    %v415 = vpack.c.bf16 %v413, %v413
    %v416 = vld [vmem:[#allocation8] sm:$0xf]
    %v417 = vld [vmem:[#allocation8 + $0x4] sm:$0xf]
    %v418 = vld [vmem:[#allocation8 + $0x8] sm:$0xf]
    %v419 = vld [vmem:[#allocation8 + $0xc] sm:$0xf]
    %v420 = vld [vmem:[#allocation8 + $0x10] sm:$0xf]
    %v421 = vld [vmem:[#allocation8 + $0x14] sm:$0xf]
    %v422 = vld [vmem:[#allocation8 + $0x18] sm:$0xf]
    %v423 = vld [vmem:[#allocation8 + $0x1c] sm:$0xf]
    %v424 = vld [vmem:[#allocation8 + $0x20] sm:$0xf]
    %v425 = vld [vmem:[#allocation8 + $0x24] sm:$0xf]
    %v426 = vld [vmem:[#allocation8 + $0x28] sm:$0xf]
    %v427 = vld [vmem:[#allocation8 + $0x2c] sm:$0xf]
    %v428 = vld [vmem:[#allocation8 + $0x30] sm:$0xf]
    %v429 = vld [vmem:[#allocation8 + $0x34] sm:$0xf]
    %v430 = vld [vmem:[#allocation8 + $0x38] sm:$0xf]
    %v431 = vld [vmem:[#allocation8 + $0x3c] sm:$0xf]
    %v432 = vld [vmem:[#allocation8 + $0x40] sm:$0xf]
    %v433 = vld [vmem:[#allocation8 + $0x44] sm:$0xf]
    %v434 = vld [vmem:[#allocation8 + $0x48] sm:$0xf]
    %v435 = vld [vmem:[#allocation8 + $0x4c] sm:$0xf]
    %v436 = vld [vmem:[#allocation8 + $0x50] sm:$0xf]
    %v437 = vld [vmem:[#allocation8 + $0x54] sm:$0xf]
    %v438 = vld [vmem:[#allocation8 + $0x58] sm:$0xf]
    %v439 = vld [vmem:[#allocation8 + $0x5c] sm:$0xf]
    %v440 = vld [vmem:[#allocation8 + $0x60] sm:$0xf]
    %v441 = vld [vmem:[#allocation8 + $0x64] sm:$0xf]
    %v442 = vld [vmem:[#allocation8 + $0x68] sm:$0xf]
    %v443 = vld [vmem:[#allocation8 + $0x6c] sm:$0xf]
    %v444 = vld [vmem:[#allocation8 + $0x70] sm:$0xf]
    %v445 = vld [vmem:[#allocation8 + $0x74] sm:$0xf]
    %v446 = vld [vmem:[#allocation8 + $0x78] sm:$0xf]
    %v447 = vld [vmem:[#allocation8 + $0x7c] sm:$0xf]
    %v448 = vld [vmem:[%s6] sm:$0x1]
    %v450 = vlaneseq
    %v451 = vshrl.u32 %v450, 7
    %v452 = vsub.s32 0, %v451
    %v453 = vrot.slane %v448, %v452
    %v487 = vunpack.c.l.b16 %v416
    %v488 = vunpack.c.l.b16 %v417
    %v489 = vunpack.c.l.b16 %v418
    %v490 = vunpack.c.l.b16 %v419
    %v491 = vunpack.c.l.b16 %v420
    %v492 = vunpack.c.l.b16 %v421
    %v493 = vunpack.c.l.b16 %v422
    %v494 = vunpack.c.l.b16 %v423
    %v495 = vunpack.c.l.b16 %v424
    %v496 = vunpack.c.l.b16 %v425
    %v497 = vunpack.c.l.b16 %v426
    %v498 = vunpack.c.l.b16 %v427
    %v499 = vunpack.c.l.b16 %v428
    %v500 = vunpack.c.l.b16 %v429
    %v501 = vunpack.c.l.b16 %v430
    %v502 = vunpack.c.l.b16 %v431
    %v503 = vunpack.c.l.b16 %v432
    %v504 = vunpack.c.l.b16 %v433
    %v505 = vunpack.c.l.b16 %v434
    %v506 = vunpack.c.l.b16 %v435
    %v507 = vunpack.c.l.b16 %v436
    %v508 = vunpack.c.l.b16 %v437
    %v509 = vunpack.c.l.b16 %v438
    %v510 = vunpack.c.l.b16 %v439
    %v511 = vunpack.c.l.b16 %v440
    %v512 = vunpack.c.l.b16 %v441
    %v513 = vunpack.c.l.b16 %v442
    %v514 = vunpack.c.l.b16 %v443
    %v515 = vunpack.c.l.b16 %v444
    %v516 = vunpack.c.l.b16 %v445
    %v517 = vunpack.c.l.b16 %v446
    %v518 = vunpack.c.l.b16 %v447
    %v519 = vpack.c.b16 %v488, %v487
    %v520 = vpack.c.b16 %v490, %v489
    %v521 = vpack.c.b16 %v492, %v491
    %v522 = vpack.c.b16 %v494, %v493
    %v523 = vpack.c.b16 %v496, %v495
    %v524 = vpack.c.b16 %v498, %v497
    %v525 = vpack.c.b16 %v500, %v499
    %v526 = vpack.c.b16 %v502, %v501
    %v527 = vpack.c.b16 %v504, %v503
    %v528 = vpack.c.b16 %v506, %v505
    %v529 = vpack.c.b16 %v508, %v507
    %v530 = vpack.c.b16 %v510, %v509
    %v531 = vpack.c.b16 %v512, %v511
    %v532 = vpack.c.b16 %v514, %v513
    %v533 = vpack.c.b16 %v516, %v515
    %v534 = vpack.c.b16 %v518, %v517
    %551 = vmatprep.subr.bf16.mxu0 0
    %552 = vmatpush1.bf16.msra.mxu0 %v519
    %553 = vmatprep.subr.bf16.mxu0 0
    %554 = vmatpush1.bf16.msra.mxu0 %v520
    %555 = vmatprep.subr.bf16.mxu0 0
    %556 = vmatpush1.bf16.msra.mxu0 %v521
    %557 = vmatprep.subr.bf16.mxu0 0
    %558 = vmatpush1.bf16.msra.mxu0 %v522
    %559 = vmatprep.subr.bf16.mxu0 0
    %560 = vmatpush1.bf16.msra.mxu0 %v523
    %561 = vmatprep.subr.bf16.mxu0 0
    %562 = vmatpush1.bf16.msra.mxu0 %v524
    %563 = vmatprep.subr.bf16.mxu0 0
    %564 = vmatpush1.bf16.msra.mxu0 %v525
    %565 = vmatprep.subr.bf16.mxu0 0
    %566 = vmatpush1.bf16.msra.mxu0 %v526
    %567 = vmatprep.subr.bf16.mxu0 0
    %568 = vmatpush1.bf16.msra.mxu0 %v527
    %569 = vmatprep.subr.bf16.mxu0 0
    %570 = vmatpush1.bf16.msra.mxu0 %v528
    %571 = vmatprep.subr.bf16.mxu0 0
    %572 = vmatpush1.bf16.msra.mxu0 %v529
    %573 = vmatprep.subr.bf16.mxu0 0
    %574 = vmatpush1.bf16.msra.mxu0 %v530
    %575 = vmatprep.subr.bf16.mxu0 0
    %576 = vmatpush1.bf16.msra.mxu0 %v531
    %577 = vmatprep.subr.bf16.mxu0 0
    %578 = vmatpush1.bf16.msra.mxu0 %v532
    %579 = vmatprep.subr.bf16.mxu0 0
    %580 = vmatpush1.bf16.msra.mxu0 %v533
    %581 = vmatprep.subr.bf16.mxu0 0
    %582 = vmatpush1.bf16.msra.mxu0 %v534
    %583 = vmatprep.mubr.bf16.mxu0 %v415
    %584 = vmatmul.mubr.bf16.gmra.mrb[0].mxu0 %v414
    %v585 = vpop.f32.mrb[0].mxu0
    %v586 = vadd.f32 %v453, %v585
    %v587 = vpop.f32.mrb[0].mxu0
    %v588 = vpop.f32.mrb[0].mxu0
    %v589 = vpop.f32.mrb[0].mxu0
    %590 = vdwg.mxu0
    %v591 = vtanh.pop %v586
    %v592 = vmul.f32 %v591, 2.0
    %v593 = vadd.f32 %v592, 0.0
    %v594 = vpack.c.bf16 %v593, %v593
    %595 = vst [vmem:[#allocation10] sm:$0xf] %v594
    // Predicated region
    $region46: #{tpu_custom_call.1} parent=1 // pred_check
      _
    $region47: #{tpu_custom_call.1} parent=1 // pred_check_branch
      %597 = sbr.rel (0) target = $region49
    $region48: #{tpu_custom_call.1} parent=1 // pred_region
      %s599 = ssub.s32 64, 64
      %600 = vsyncadd [#allocation4], %s599
      %s602 = sshll.u32 [#allocation10], 4
      %s603 = int_to_ptr.vmem [resolvable:$true] %s602
      %605 = dma.vmem_to_hbm [thread:$0]  %s603, 64, %s7, [#allocation4]
    $region49: #{tpu_custom_call.1} parent=1 // pred_fallthru
      _
    // Predicated region
    $region50: #{tpu_custom_call.1} parent=1 // pred_check
      _
    $region51: #{tpu_custom_call.1} parent=1 // pred_check_branch
      %607 = sbr.rel (0) target = $region53
    $region52: #{tpu_custom_call.1} parent=1 // pred_region
      %608 = dma.done [#allocation4], 64
    $region53: #{tpu_custom_call.1} parent=1 // pred_fallthru
      _
    %609 = vsyncpa [#allocation3], 1
    %610 = vsyncpa [#allocation6], 1
    %611 = vsyncpa [#allocation9], 1
    %612 = vsyncpa [#allocation4], 1

</llo_original>
